<compile_context>
chip_gen: v7x
topology: tpu7x:2x2x1
jax: 0.10.0
libtpu: 0.0.40
codegen_flags: <defaults>
</compile_context>

<pallas_src>
import jax
import jax.numpy as jnp
from jax.experimental import pallas as pl
from jax.experimental.pallas import tpu as pltpu


_LANES = 128
_MAX_COLS = 1024                          # lane width cap for the flattened slab
_BLOCK_BYTES_TARGET = 4 * 1024 * 1024     # ~4 MiB per buffer (padded bytes)
_SMALL_SINGLE_BLOCK_BYTES = 8 * 1024 * 1024   # whole-array single block cap
_VMEM_LIMIT_BYTES = 32 * 1024 * 1024      # covers 2x(in+out) double buffering


def _identity_copy_kernel(x_ref, o_ref):
    # Pure copy: the identity forward.
    o_ref[...] = x_ref[...]


def _sublane_multiple(dtype) -> int:
    # Minimum second-to-last block dim when it does not equal the full dim:
    # 8 for 32-bit, 16 for bf16/fp16, 32 for int8/fp8.
    itemsize = jnp.dtype(dtype).itemsize
    return max(8, 32 // max(itemsize, 1))


def _round_up(v: int, m: int) -> int:
    return ((v + m - 1) // m) * m


def _tiled_copy(x, grid, spec):
    return pl.pallas_call(
        _identity_copy_kernel,
        out_shape=jax.ShapeDtypeStruct(x.shape, x.dtype),
        grid_spec=pltpu.PrefetchScalarGridSpec(
            num_scalar_prefetch=0,
            grid=grid,
            in_specs=[spec],
            out_specs=spec,
        ),
        compiler_params=pltpu.CompilerParams(
            dimension_semantics=("parallel",),
            vmem_limit_bytes=_VMEM_LIMIT_BYTES,
        ),
    )(x)


def _copy_whole(x):
    # Whole array as a single VMEM block (block dims == array dims is always
    # layout-legal).  Only used for small / awkwardly shaped inputs.
    return pl.pallas_call(
        _identity_copy_kernel,
        out_shape=jax.ShapeDtypeStruct(x.shape, x.dtype),
        compiler_params=pltpu.CompilerParams(
            vmem_limit_bytes=_VMEM_LIMIT_BYTES,
        ),
    )(x)


def _copy_2d(x2d):
    # Lane-dense slab: cols is a multiple of 128, so blocks have no lane
    # padding and the logical bytes equal the padded VMEM bytes.
    rows, cols = x2d.shape
    itemsize = jnp.dtype(x2d.dtype).itemsize
    sub = _sublane_multiple(x2d.dtype)
    row_bytes = cols * itemsize
    brows = max(1, _BLOCK_BYTES_TARGET // row_bytes)
    if brows >= rows:
        brows = rows                              # single block along rows
    else:
        brows = max(sub, (brows // sub) * sub)    # sublane-aligned chunk
        if brows >= rows:
            brows = rows
    grid = (pl.cdiv(rows, brows),)
    spec = pl.BlockSpec((brows, cols), lambda i: (i, 0))
    return _tiled_copy(x2d, grid, spec)


def _copy_fallback(x):
    # Total element count is not a multiple of 128 lanes: keep the original
    # shape.  Small arrays go through as one full-array block; larger ones
    # chunk the leading axis with all trailing dims kept whole.  Block sizing
    # uses the *padded* VMEM footprint (last dim up to 128 lanes, second-to-
    # last up to the dtype sublane multiple).
    itemsize = jnp.dtype(x.dtype).itemsize
    sub = _sublane_multiple(x.dtype)
    shape = x.shape
    n0 = shape[0]
    trailing = shape[1:]

    if x.ndim == 1:
        padded_total = _round_up(n0, _LANES) * itemsize
        if padded_total <= _SMALL_SINGLE_BLOCK_BYTES:
            return _copy_whole(x)
        bn = max(_LANES, ((_BLOCK_BYTES_TARGET // itemsize) // _LANES) * _LANES)
        grid = (pl.cdiv(n0, bn),)
        spec = pl.BlockSpec((bn,), lambda i: (i,))
        return _tiled_copy(x, grid, spec)

    padded_trailing = list(trailing)
    padded_trailing[-1] = _round_up(padded_trailing[-1], _LANES)
    if len(padded_trailing) >= 2:
        padded_trailing[-2] = _round_up(padded_trailing[-2], sub)
    row_bytes = itemsize
    for d in padded_trailing:
        row_bytes *= d
    lead_padded = _round_up(n0, sub) if x.ndim == 2 else n0
    if lead_padded * row_bytes <= _SMALL_SINGLE_BLOCK_BYTES:
        return _copy_whole(x)

    bn = max(1, _BLOCK_BYTES_TARGET // row_bytes)
    if bn >= n0:
        bn = n0
    elif x.ndim == 2:
        # bn is the second-to-last block dim here: sublane multiple or full.
        bn = max(sub, (bn // sub) * sub)
        if bn >= n0:
            bn = n0
    zeros = (0,) * len(trailing)
    grid = (pl.cdiv(n0, bn),)
    spec = pl.BlockSpec((bn,) + trailing, lambda i: (i,) + zeros)
    return _tiled_copy(x, grid, spec)


def identity_forward(x: jax.Array, channel: int | None = None,
                     *, use_pallas: bool = True) -> jax.Array:
    """Pallas implementation of Identity.forward (returns x unchanged).

    `channel` is accepted for API parity with the PyTorch module but unused,
    exactly like in the reference implementation.  With use_pallas=False the
    function is a true zero-cost no-op (the fastest possible identity); the
    default runs an explicit lane-dense Pallas copy kernel.
    """
    if not use_pallas or x.ndim == 0 or x.size == 0:
        return x

    n = x.size
    if n % _LANES == 0:
        # Flatten (contiguous, metadata-only under jit) to a lane-dense 2-D
        # slab: last dim a multiple of 128 lanes -> unmasked full-width
        # stores and no VMEM lane padding.
        cols = _LANES
        while cols * 2 <= _MAX_COLS and n % (cols * 2) == 0:
            cols *= 2
        rows = n // cols
        return _copy_2d(x.reshape(rows, cols)).reshape(x.shape)

    # TODO(synk): awkward total sizes (not a multiple of 128) fall back to a
    # shape-preserving tiling rather than a padded lane-dense flatten.
    return _copy_fallback(x)


if __name__ == "__main__":
    key = jax.random.PRNGKey(0)
    # Small NCHW input consistent with a MobileNetV2 feature map.
    x = jax.random.normal(key, (2, 4, 16, 16), dtype=jnp.float32)

    # jit so the lane-dense reshape around the kernel stays metadata-only.
    fwd = jax.jit(lambda t: identity_forward(t, channel=4))
    y = jax.block_until_ready(fwd(x))

    assert y.shape == x.shape and y.dtype == x.dtype
    assert bool(jnp.array_equal(y, x))
    print("KERNEL_OK")
</pallas_src>

<mosaic_0001>
module attributes {stable_mosaic.version = 11 : i64} {
  func.func @_identity_copy_kernel(%arg0: i32, %arg1: memref<2x1024xf32, #tpu.memory_space<vmem>>, %arg2: memref<2x1024xf32, #tpu.memory_space<vmem>>) attributes {dimension_semantics = [#tpu.dimension_semantics<parallel>], iteration_bounds = array<i64: 1>, scalar_prefetch = 0 : i64, scratch_operands = 0 : i64, tpu.core_type = #tpu.core_type<tc>, window_params = [{transform_indices = @transform_0, window_bounds = array<i64: 2, 1024>}, {transform_indices = @transform_1, window_bounds = array<i64: 2, 1024>}]} {
    %c0 = arith.constant 0 : index
    %c0_0 = arith.constant 0 : index
    %0 = vector.load %arg1[%c0, %c0_0] : memref<2x1024xf32, #tpu.memory_space<vmem>>, vector<2x1024xf32>
    %c0_1 = arith.constant 0 : index
    %c0_2 = arith.constant 0 : index
    %1 = vector.load %arg2[%c0_1, %c0_2] : memref<2x1024xf32, #tpu.memory_space<vmem>>, vector<2x1024xf32>
    tpu.vector_store %arg2[%c0_1, %c0_2], %0 {strides = array<i32>} : memref<2x1024xf32, #tpu.memory_space<vmem>>, vector<2x1024xf32>,
    return
  }
  func.func @transform_0(%arg0: i32) -> (i32, i32) {
    %c0_i32 = arith.constant 0 : i32
    %c0_i32_0 = arith.constant 0 : i32
    return %arg0, %c0_i32 : i32, i32
  }
  func.func @transform_1(%arg0: i32) -> (i32, i32) {
    %c0_i32 = arith.constant 0 : i32
    %c0_i32_0 = arith.constant 0 : i32
    return %arg0, %c0_i32 : i32, i32
  }
}

</mosaic_0001>

<llo_original>
// kernel: _lambda_.1
$region0: #{_lambda_.1}
  #allocation0 [shape = 'u32[]', space=smem, size = 0x4, offset = 0x4, fixed_abs, tag = 'smem constant byte address 0x4 - core index']
  #allocation1 [shape = 'u32[144,128]{1,0:T(1,128)}', space=vmem, size = 0x12000, scoped, tag = 'internal scratch']
  %s0 = inlined_call_operand.vmem [shape: f32[2,1024], index: 0, kind: input, shape index: {}]
  %s1 = inlined_call_operand.vmem [shape: f32[2,1024], index: 1, kind: output, shape index: {}]
  %s2 = sld [smem:[#allocation0]]
  $region14: #{_lambda_.1} parent=0
    _
  %s4 = ssub.s32 1, %s2
  %s5 = scalar_select 0, %s4, %s2
  // Predicated region
  $region2: #{_lambda_.1} parent=0 // pred_check
    _
  $region3: #{_lambda_.1} parent=0 // pred_check_branch
    %7 = sbr.rel (0) target = $region5
  $region4: #{_lambda_.1} parent=0 // pred_region
    _
  $region5: #{_lambda_.1} parent=0 // pred_fallthru
    _
  %v8 = vld [vmem:[%s0] sm:$0xff]
  %v9 = vld [vmem:[%s0 + $0x8] sm:$0xff]
  %10 = vst [vmem:[%s1] sm:$0xff] %v8
  %11 = vst [vmem:[%s1 + $0x8] sm:$0xff] %v9
  // Predicated region
  $region6: #{_lambda_.1} parent=0 // pred_check
    _
  $region7: #{_lambda_.1} parent=0 // pred_check_branch
    %13 = sbr.rel (0) target = $region9
  $region8: #{_lambda_.1} parent=0 // pred_region
    _
  $region9: #{_lambda_.1} parent=0 // pred_fallthru
    _
  // Predicated region
  $region10: #{_lambda_.1} parent=0 // pred_check
    _
  $region11: #{_lambda_.1} parent=0 // pred_check_branch
    %15 = sbr.rel (0) target = $region13
  $region12: #{_lambda_.1} parent=0 // pred_region
    _
  $region13: #{_lambda_.1} parent=0 // pred_fallthru
    _

</llo_original>
